<compile_context>
chip_gen: v6e
topology: v6e:2x2x1
jax: 0.10.0
libtpu: 0.0.40
codegen_flags: <defaults>
</compile_context>

<pallas_src>
import math

import jax
import jax.numpy as jnp
from jax.experimental import pallas as pl
from jax.experimental.pallas import tpu as pltpu  # noqa: F401  (kept for tiled path)


_SUBLANE = 8    # f32 sublane tile
_LANE = 128     # lane tile


def _round_up(x, m):
    return (x + m - 1) // m * m


def _linear_kernel(x_ref, w_ref, b_ref, o_ref):
    # Single-step kernel: one (Bp, D) x (D, Np) MXU matmul with f32
    # accumulation, bias added once, full-width lane-dense store.
    o_ref[...] = (
        jnp.dot(x_ref[...], w_ref[...], preferred_element_type=jnp.float32)
        + b_ref[...]
    ).astype(o_ref.dtype)


def prepare_params(weight, bias):
    """One-time parameter prep — do NOT call per forward step.

    weight : (N, D) float32 (PyTorch nn.Linear layout)
    bias   : (N,)   float32
    Returns (w_t_padded (D, Np), b_padded (1, Np)) with Np = round_up(N, 128),
    so the kernel's output last dim is lane-dense and no per-call transpose
    or lane padding is needed.
    """
    N, D = weight.shape
    Np = _round_up(N, _LANE)
    w_t = jnp.zeros((D, Np), weight.dtype).at[:, :N].set(weight.T)
    b_p = jnp.zeros((1, Np), bias.dtype).at[0, :N].set(bias)
    return w_t, b_p


def basicnet_forward(x_nchw, w_t_padded, b_padded, num_outputs):
    """Forward pass of BasicNet: Flatten + Linear.

    x_nchw      : (B, C, H, W) float32
    w_t_padded  : (D, Np) float32 from prepare_params (D = C*H*W, Np % 128 == 0)
    b_padded    : (1, Np) float32 from prepare_params
    num_outputs : true N (static); result is sliced back to (B, num_outputs)
    """
    B = x_nchw.shape[0]
    D = math.prod(x_nchw.shape[1:])
    Np = w_t_padded.shape[1]
    assert w_t_padded.shape[0] == D
    assert num_outputs <= Np

    # nn.Flatten (row-major, identical to torch), then pad batch to a sublane
    # multiple so the LHS / output blocks are (8, 128)-tiled.
    x2d = x_nchw.reshape(B, D)
    Bp = _round_up(B, _SUBLANE)
    if Bp != B:
        x2d = jnp.pad(x2d, ((0, Bp - B), (0, 0)))

    # All operands resident in VMEM: x (Bp*D) + w (D*Np) + b (Np) + out (Bp*Np),
    # f32. At the demo shapes this is ~0.5 MiB — single grid step, no scratch.
    vmem_bytes = 4 * (Bp * D + D * Np + Np + Bp * Np)
    assert vmem_bytes < 16 * 1024 * 1024, (
        "shapes too large for the single-step path"
    )  # TODO(synk): add a tiled (M, N, K) grid path (128/256-multiple tiles,
    #              bf16 MXU inputs, parallel M/N axes) for large B/D/N.

    out = pl.pallas_call(
        _linear_kernel,
        out_shape=jax.ShapeDtypeStruct((Bp, Np), x2d.dtype),
    )(x2d, w_t_padded, b_padded)

    return out[:B, :num_outputs]


if __name__ == "__main__":
    # Small shapes consistent with the module: batch=2, channels=4, 16x16.
    B, C, H, W = 2, 4, 16, 16
    NUM_OUTPUTS = 8
    D = C * H * W

    key = jax.random.PRNGKey(0)
    kx, kw, kb = jax.random.split(key, 3)

    x = jax.random.normal(kx, (B, C, H, W), dtype=jnp.float32)

    # Deterministic parameter init (nn.Linear-style uniform(+-1/sqrt(D))).
    bound = 1.0 / math.sqrt(D)
    weight = jax.random.uniform(kw, (NUM_OUTPUTS, D), jnp.float32, -bound, bound)
    bias = jax.random.uniform(kb, (NUM_OUTPUTS,), jnp.float32, -bound, bound)

    # One-time parameter prep (transpose + lane padding) — outside the forward.
    w_t_p, b_p = jax.block_until_ready(prepare_params(weight, bias))

    fwd = jax.jit(basicnet_forward, static_argnums=(3,))
    y = fwd(x, w_t_p, b_p, NUM_OUTPUTS)
    jax.block_until_ready(y)

    # Reference check in plain JAX.
    y_ref = x.reshape(B, D) @ weight.T + bias
    assert y.shape == (B, NUM_OUTPUTS)
    assert jnp.allclose(y, y_ref, atol=1e-5, rtol=1e-5), "mismatch vs reference"

    print("KERNEL_OK")
</pallas_src>

<mosaic_0001>
module attributes {stable_mosaic.version = 11 : i64} {
  func.func @_linear_kernel(%arg0: memref<8x1024xf32, #tpu.memory_space<vmem>>, %arg1: memref<1024x128xf32, #tpu.memory_space<vmem>>, %arg2: memref<1x128xf32, #tpu.memory_space<vmem>>, %arg3: memref<8x128xf32, #tpu.memory_space<vmem>>) attributes {dimension_semantics = [], scalar_prefetch = 0 : i64, scratch_operands = 0 : i64, tpu.core_type = #tpu.core_type<tc>} {
    %c0 = arith.constant 0 : index
    %c0_0 = arith.constant 0 : index
    %0 = vector.load %arg0[%c0, %c0_0] : memref<8x1024xf32, #tpu.memory_space<vmem>>, vector<8x1024xf32>
    %c0_1 = arith.constant 0 : index
    %c0_2 = arith.constant 0 : index
    %1 = vector.load %arg1[%c0_1, %c0_2] : memref<1024x128xf32, #tpu.memory_space<vmem>>, vector<1024x128xf32>
    %cst = arith.constant dense<0.000000e+00> : vector<8x128xf32>
    %2 = tpu.matmul %0, %1, %cst {dimension_numbers = #tpu.dot_dimension_numbers<[1], [0], [0], [1], [0, 0, 1, 1], [], []>} : vector<8x1024xf32>, vector<1024x128xf32>, vector<8x128xf32> -> vector<8x128xf32>
    %c0_3 = arith.constant 0 : index
    %c0_4 = arith.constant 0 : index
    %3 = vector.load %arg2[%c0_3, %c0_4] : memref<1x128xf32, #tpu.memory_space<vmem>>, vector<1x128xf32>
    %4 = vector.broadcast %3 : vector<1x128xf32> to vector<8x128xf32>
    %5 = arith.addf %2, %4 : vector<8x128xf32>
    %c0_5 = arith.constant 0 : index
    %c0_6 = arith.constant 0 : index
    %6 = vector.load %arg3[%c0_5, %c0_6] : memref<8x128xf32, #tpu.memory_space<vmem>>, vector<8x128xf32>
    tpu.vector_store %arg3[%c0_5, %c0_6], %5 {strides = array<i32>} : memref<8x128xf32, #tpu.memory_space<vmem>>, vector<8x128xf32>,
    return
  }
}

</mosaic_0001>

<llo_original>
// kernel: basicnet_forward.1
$region0: #{basicnet_forward.1}
  #allocation0 [shape = 'u32[]', space=smem, size = 0x4, offset = 0x4, fixed_abs, tag = 'smem constant byte address 0x4 - core index']
  #allocation1 [shape = 'u32[144,128]{1,0:T(1,128)}', space=vmem, size = 0x12000, scoped, tag = 'internal scratch']
  %s0 = inlined_call_operand.vmem [shape: f32[8,1024], index: 0, kind: input, shape index: {}]
  %s1 = inlined_call_operand.hbm [shape: f32[1024,128], index: 1, kind: input, shape index: {}]
  %s2 = inlined_call_operand.vmem [shape: f32[1,128], index: 2, kind: input, shape index: {}]
  %s3 = inlined_call_operand.vmem [shape: f32[8,128], index: 3, kind: output, shape index: {}]
  %s4 = sld [smem:[#allocation0]]
  $region26: #{basicnet_forward.1} parent=0
    _
  %s6 = ssub.s32 1, %s4
  %s7 = scalar_select 0, %s6, %s4
  $region1: #{basicnet_forward.1} parent=0
    #allocation2 [shape = 'u8[524288]{0}', space=vmem, size = 0x80000, scoped, tag = 'input window, operand 1, single buffered']
    #allocation3 [shape = 's32[1]{0}', space=sflag, size = 0x4, scoped, tag = 'scoped memory for basicnet_forward.1']
    %8 = vsyncpa [#allocation3], 0
    // Predicated region
    $region2: #{basicnet_forward.1} parent=1 // pred_check
      _
    $region3: #{basicnet_forward.1} parent=1 // pred_check_branch
      %10 = sbr.rel (0) target = $region5
    $region4: #{basicnet_forward.1} parent=1 // pred_region
      _
    $region5: #{basicnet_forward.1} parent=1 // pred_fallthru
      _
    // Predicated region
    $region6: #{basicnet_forward.1} parent=1 // pred_check
      _
    $region7: #{basicnet_forward.1} parent=1 // pred_check_branch
      %12 = sbr.rel (0) target = $region9
    $region8: #{basicnet_forward.1} parent=1 // pred_region
      %s14 = ssub.s32 16384, 16384
      %15 = vsyncadd [#allocation3], %s14
      %s16 = sshll.u32 [#allocation2], 4
      %s17 = int_to_ptr.vmem [resolvable:$true] %s16
      %22 = dma.hbm_to_vmem [thread:$0]  %s1, 16384, %s17, [#allocation3], 128, 128, 8
    $region9: #{basicnet_forward.1} parent=1 // pred_fallthru
      _
    // Predicated region
    $region10: #{basicnet_forward.1} parent=1 // pred_check
      _
    $region11: #{basicnet_forward.1} parent=1 // pred_check_branch
      %24 = sbr.rel (0) target = $region13
    $region12: #{basicnet_forward.1} parent=1 // pred_region
      _
    $region13: #{basicnet_forward.1} parent=1 // pred_fallthru
      _
    // Predicated region
    $region14: #{basicnet_forward.1} parent=1 // pred_check
      _
    $region15: #{basicnet_forward.1} parent=1 // pred_check_branch
      %26 = sbr.rel (0) target = $region17
    $region16: #{basicnet_forward.1} parent=1 // pred_region
      %27 = dma.done [#allocation3], 16384
    $region17: #{basicnet_forward.1} parent=1 // pred_fallthru
      _
    %v28 = vld [vmem:[%s0] sm:$0xff]
    %v29 = vld [vmem:[%s0 + $0x8] sm:$0xff]
    %v30 = vld [vmem:[%s0 + $0x10] sm:$0xff]
    %v31 = vld [vmem:[%s0 + $0x18] sm:$0xff]
    %v32 = vld [vmem:[%s0 + $0x20] sm:$0xff]
    %v33 = vld [vmem:[%s0 + $0x28] sm:$0xff]
    %v34 = vld [vmem:[%s0 + $0x30] sm:$0xff]
    %v35 = vld [vmem:[%s0 + $0x38] sm:$0xff]
    %v36 = vld [vmem:[#allocation2] sm:$0xff]
    %v37 = vld [vmem:[#allocation2 + $0x8] sm:$0xff]
    %v38 = vld [vmem:[#allocation2 + $0x10] sm:$0xff]
    %v39 = vld [vmem:[#allocation2 + $0x18] sm:$0xff]
    %v40 = vld [vmem:[#allocation2 + $0x20] sm:$0xff]
    %v41 = vld [vmem:[#allocation2 + $0x28] sm:$0xff]
    %v42 = vld [vmem:[#allocation2 + $0x30] sm:$0xff]
    %v43 = vld [vmem:[#allocation2 + $0x38] sm:$0xff]
    %v44 = vld [vmem:[#allocation2 + $0x40] sm:$0xff]
    %v45 = vld [vmem:[#allocation2 + $0x48] sm:$0xff]
    %v46 = vld [vmem:[#allocation2 + $0x50] sm:$0xff]
    %v47 = vld [vmem:[#allocation2 + $0x58] sm:$0xff]
    %v48 = vld [vmem:[#allocation2 + $0x60] sm:$0xff]
    %v49 = vld [vmem:[#allocation2 + $0x68] sm:$0xff]
    %v50 = vld [vmem:[#allocation2 + $0x70] sm:$0xff]
    %v51 = vld [vmem:[#allocation2 + $0x78] sm:$0xff]
    %v52 = vld [vmem:[#allocation2 + $0x80] sm:$0xff]
    %v53 = vld [vmem:[#allocation2 + $0x88] sm:$0xff]
    %v54 = vld [vmem:[#allocation2 + $0x90] sm:$0xff]
    %v55 = vld [vmem:[#allocation2 + $0x98] sm:$0xff]
    %v56 = vld [vmem:[#allocation2 + $0xa0] sm:$0xff]
    %v57 = vld [vmem:[#allocation2 + $0xa8] sm:$0xff]
    %v58 = vld [vmem:[#allocation2 + $0xb0] sm:$0xff]
    %v59 = vld [vmem:[#allocation2 + $0xb8] sm:$0xff]
    %v60 = vld [vmem:[#allocation2 + $0xc0] sm:$0xff]
    %v61 = vld [vmem:[#allocation2 + $0xc8] sm:$0xff]
    %v62 = vld [vmem:[#allocation2 + $0xd0] sm:$0xff]
    %v63 = vld [vmem:[#allocation2 + $0xd8] sm:$0xff]
    %v64 = vld [vmem:[#allocation2 + $0xe0] sm:$0xff]
    %v65 = vld [vmem:[#allocation2 + $0xe8] sm:$0xff]
    %v66 = vld [vmem:[#allocation2 + $0xf0] sm:$0xff]
    %v67 = vld [vmem:[#allocation2 + $0xf8] sm:$0xff]
    %v68 = vld [vmem:[#allocation2 + $0x100] sm:$0xff]
    %v69 = vld [vmem:[#allocation2 + $0x108] sm:$0xff]
    %v70 = vld [vmem:[#allocation2 + $0x110] sm:$0xff]
    %v71 = vld [vmem:[#allocation2 + $0x118] sm:$0xff]
    %v72 = vld [vmem:[#allocation2 + $0x120] sm:$0xff]
    %v73 = vld [vmem:[#allocation2 + $0x128] sm:$0xff]
    %v74 = vld [vmem:[#allocation2 + $0x130] sm:$0xff]
    %v75 = vld [vmem:[#allocation2 + $0x138] sm:$0xff]
    %v76 = vld [vmem:[#allocation2 + $0x140] sm:$0xff]
    %v77 = vld [vmem:[#allocation2 + $0x148] sm:$0xff]
    %v78 = vld [vmem:[#allocation2 + $0x150] sm:$0xff]
    %v79 = vld [vmem:[#allocation2 + $0x158] sm:$0xff]
    %v80 = vld [vmem:[#allocation2 + $0x160] sm:$0xff]
    %v81 = vld [vmem:[#allocation2 + $0x168] sm:$0xff]
    %v82 = vld [vmem:[#allocation2 + $0x170] sm:$0xff]
    %v83 = vld [vmem:[#allocation2 + $0x178] sm:$0xff]
    %v84 = vld [vmem:[#allocation2 + $0x180] sm:$0xff]
    %v85 = vld [vmem:[#allocation2 + $0x188] sm:$0xff]
    %v86 = vld [vmem:[#allocation2 + $0x190] sm:$0xff]
    %v87 = vld [vmem:[#allocation2 + $0x198] sm:$0xff]
    %v88 = vld [vmem:[#allocation2 + $0x1a0] sm:$0xff]
    %v89 = vld [vmem:[#allocation2 + $0x1a8] sm:$0xff]
    %v90 = vld [vmem:[#allocation2 + $0x1b0] sm:$0xff]
    %v91 = vld [vmem:[#allocation2 + $0x1b8] sm:$0xff]
    %v92 = vld [vmem:[#allocation2 + $0x1c0] sm:$0xff]
    %v93 = vld [vmem:[#allocation2 + $0x1c8] sm:$0xff]
    %v94 = vld [vmem:[#allocation2 + $0x1d0] sm:$0xff]
    %v95 = vld [vmem:[#allocation2 + $0x1d8] sm:$0xff]
    %v96 = vld [vmem:[#allocation2 + $0x1e0] sm:$0xff]
    %v97 = vld [vmem:[#allocation2 + $0x1e8] sm:$0xff]
    %v98 = vld [vmem:[#allocation2 + $0x1f0] sm:$0xff]
    %v99 = vld [vmem:[#allocation2 + $0x1f8] sm:$0xff]
    %v100 = vld [vmem:[#allocation2 + $0x200] sm:$0xff]
    %v101 = vld [vmem:[#allocation2 + $0x208] sm:$0xff]
    %v102 = vld [vmem:[#allocation2 + $0x210] sm:$0xff]
    %v103 = vld [vmem:[#allocation2 + $0x218] sm:$0xff]
    %v104 = vld [vmem:[#allocation2 + $0x220] sm:$0xff]
    %v105 = vld [vmem:[#allocation2 + $0x228] sm:$0xff]
    %v106 = vld [vmem:[#allocation2 + $0x230] sm:$0xff]
    %v107 = vld [vmem:[#allocation2 + $0x238] sm:$0xff]
    %v108 = vld [vmem:[#allocation2 + $0x240] sm:$0xff]
    %v109 = vld [vmem:[#allocation2 + $0x248] sm:$0xff]
    %v110 = vld [vmem:[#allocation2 + $0x250] sm:$0xff]
    %v111 = vld [vmem:[#allocation2 + $0x258] sm:$0xff]
    %v112 = vld [vmem:[#allocation2 + $0x260] sm:$0xff]
    %v113 = vld [vmem:[#allocation2 + $0x268] sm:$0xff]
    %v114 = vld [vmem:[#allocation2 + $0x270] sm:$0xff]
    %v115 = vld [vmem:[#allocation2 + $0x278] sm:$0xff]
    %v116 = vld [vmem:[#allocation2 + $0x280] sm:$0xff]
    %v117 = vld [vmem:[#allocation2 + $0x288] sm:$0xff]
    %v118 = vld [vmem:[#allocation2 + $0x290] sm:$0xff]
    %v119 = vld [vmem:[#allocation2 + $0x298] sm:$0xff]
    %v120 = vld [vmem:[#allocation2 + $0x2a0] sm:$0xff]
    %v121 = vld [vmem:[#allocation2 + $0x2a8] sm:$0xff]
    %v122 = vld [vmem:[#allocation2 + $0x2b0] sm:$0xff]
    %v123 = vld [vmem:[#allocation2 + $0x2b8] sm:$0xff]
    %v124 = vld [vmem:[#allocation2 + $0x2c0] sm:$0xff]
    %v125 = vld [vmem:[#allocation2 + $0x2c8] sm:$0xff]
    %v126 = vld [vmem:[#allocation2 + $0x2d0] sm:$0xff]
    %v127 = vld [vmem:[#allocation2 + $0x2d8] sm:$0xff]
    %v128 = vld [vmem:[#allocation2 + $0x2e0] sm:$0xff]
    %v129 = vld [vmem:[#allocation2 + $0x2e8] sm:$0xff]
    %v130 = vld [vmem:[#allocation2 + $0x2f0] sm:$0xff]
    %v131 = vld [vmem:[#allocation2 + $0x2f8] sm:$0xff]
    %v132 = vld [vmem:[#allocation2 + $0x300] sm:$0xff]
    %v133 = vld [vmem:[#allocation2 + $0x308] sm:$0xff]
    %v134 = vld [vmem:[#allocation2 + $0x310] sm:$0xff]
    %v135 = vld [vmem:[#allocation2 + $0x318] sm:$0xff]
    %v136 = vld [vmem:[#allocation2 + $0x320] sm:$0xff]
    %v137 = vld [vmem:[#allocation2 + $0x328] sm:$0xff]
    %v138 = vld [vmem:[#allocation2 + $0x330] sm:$0xff]
    %v139 = vld [vmem:[#allocation2 + $0x338] sm:$0xff]
    %v140 = vld [vmem:[#allocation2 + $0x340] sm:$0xff]
    %v141 = vld [vmem:[#allocation2 + $0x348] sm:$0xff]
    %v142 = vld [vmem:[#allocation2 + $0x350] sm:$0xff]
    %v143 = vld [vmem:[#allocation2 + $0x358] sm:$0xff]
    %v144 = vld [vmem:[#allocation2 + $0x360] sm:$0xff]
    %v145 = vld [vmem:[#allocation2 + $0x368] sm:$0xff]
    %v146 = vld [vmem:[#allocation2 + $0x370] sm:$0xff]
    %v147 = vld [vmem:[#allocation2 + $0x378] sm:$0xff]
    %v148 = vld [vmem:[#allocation2 + $0x380] sm:$0xff]
    %v149 = vld [vmem:[#allocation2 + $0x388] sm:$0xff]
    %v150 = vld [vmem:[#allocation2 + $0x390] sm:$0xff]
    %v151 = vld [vmem:[#allocation2 + $0x398] sm:$0xff]
    %v152 = vld [vmem:[#allocation2 + $0x3a0] sm:$0xff]
    %v153 = vld [vmem:[#allocation2 + $0x3a8] sm:$0xff]
    %v154 = vld [vmem:[#allocation2 + $0x3b0] sm:$0xff]
    %v155 = vld [vmem:[#allocation2 + $0x3b8] sm:$0xff]
    %v156 = vld [vmem:[#allocation2 + $0x3c0] sm:$0xff]
    %v157 = vld [vmem:[#allocation2 + $0x3c8] sm:$0xff]
    %v158 = vld [vmem:[#allocation2 + $0x3d0] sm:$0xff]
    %v159 = vld [vmem:[#allocation2 + $0x3d8] sm:$0xff]
    %v160 = vld [vmem:[#allocation2 + $0x3e0] sm:$0xff]
    %v161 = vld [vmem:[#allocation2 + $0x3e8] sm:$0xff]
    %v162 = vld [vmem:[#allocation2 + $0x3f0] sm:$0xff]
    %v163 = vld [vmem:[#allocation2 + $0x3f8] sm:$0xff]
    %v164 = vld [vmem:[%s2] sm:$0x1]
    %v166 = vlaneseq
    %v167 = vshrl.u32 %v166, 7
    %v168 = vsub.s32 0, %v167
    %v169 = vrot.slane %v164, %v168
    %171 = vmatprep.subr.mxu0 0.0
    %172 = vmatpush1.msra.mxu0 %v51
    %173 = vmatprep.subr.mxu0 0.0
    %174 = vmatpush1.msra.mxu0 %v50
    %175 = vmatprep.subr.mxu0 0.0
    %176 = vmatpush1.msra.mxu0 %v49
    %177 = vmatprep.subr.mxu0 0.0
    %178 = vmatpush1.msra.mxu0 %v48
    %179 = vmatprep.subr.mxu0 0.0
    %180 = vmatpush1.msra.mxu0 %v47
    %181 = vmatprep.subr.mxu0 0.0
    %182 = vmatpush1.msra.mxu0 %v46
    %183 = vmatprep.subr.mxu0 0.0
    %184 = vmatpush1.msra.mxu0 %v45
    %185 = vmatprep.subr.mxu0 0.0
    %186 = vmatpush1.msra.mxu0 %v44
    %187 = vmatprep.subr.mxu0 0.0
    %188 = vmatpush1.msra.mxu0 %v43
    %189 = vmatprep.subr.mxu0 0.0
    %190 = vmatpush1.msra.mxu0 %v42
    %191 = vmatprep.subr.mxu0 0.0
    %192 = vmatpush1.msra.mxu0 %v41
    %193 = vmatprep.subr.mxu0 0.0
    %194 = vmatpush1.msra.mxu0 %v40
    %195 = vmatprep.subr.mxu0 0.0
    %196 = vmatpush1.msra.mxu0 %v39
    %197 = vmatprep.subr.mxu0 0.0
    %198 = vmatpush1.msra.mxu0 %v38
    %199 = vmatprep.subr.mxu0 0.0
    %200 = vmatpush1.msra.mxu0 %v37
    %201 = vmatprep.subr.mxu0 0.0
    %202 = vmatpush1.msra.mxu0 %v36
    %203 = vmatprep.subr.mxu0 0.0
    %204 = vmatpush2.msra.mxu0 %v67
    %205 = vmatprep.subr.mxu0 0.0
    %206 = vmatpush2.msra.mxu0 %v66
    %207 = vmatprep.subr.mxu0 0.0
    %208 = vmatpush2.msra.mxu0 %v65
    %209 = vmatprep.subr.mxu0 0.0
    %210 = vmatpush2.msra.mxu0 %v64
    %211 = vmatprep.subr.mxu0 0.0
    %212 = vmatpush2.msra.mxu0 %v63
    %213 = vmatprep.subr.mxu0 0.0
    %214 = vmatpush2.msra.mxu0 %v62
    %215 = vmatprep.subr.mxu0 0.0
    %216 = vmatpush2.msra.mxu0 %v61
    %217 = vmatprep.subr.mxu0 0.0
    %218 = vmatpush2.msra.mxu0 %v60
    %219 = vmatprep.subr.mxu0 0.0
    %220 = vmatpush2.msra.mxu0 %v59
    %221 = vmatprep.subr.mxu0 0.0
    %222 = vmatpush2.msra.mxu0 %v58
    %223 = vmatprep.subr.mxu0 0.0
    %224 = vmatpush2.msra.mxu0 %v57
    %225 = vmatprep.subr.mxu0 0.0
    %226 = vmatpush2.msra.mxu0 %v56
    %227 = vmatprep.subr.mxu0 0.0
    %228 = vmatpush2.msra.mxu0 %v55
    %229 = vmatprep.subr.mxu0 0.0
    %230 = vmatpush2.msra.mxu0 %v54
    %231 = vmatprep.subr.mxu0 0.0
    %232 = vmatpush2.msra.mxu0 %v53
    %233 = vmatprep.subr.mxu0 0.0
    %234 = vmatpush2.msra.mxu0 %v52
    %235 = vmatprep.mubr.f32.mxu0 %v29
    %236 = vmatmul.mubr.f32.gmra.mxu0 %v28
    %v237 = vpop.f32.mrf.mxu0
    %v238 = vadd.f32 %v169, %v237
    %v239 = vpop.f32.mrf.mxu0
    %240 = vdwg.mxu0
    %241 = vmatprep.subr.mxu0 0.0
    %242 = vmatpush1.msra.mxu0 %v83
    %243 = vmatprep.subr.mxu0 0.0
    %244 = vmatpush1.msra.mxu0 %v82
    %245 = vmatprep.subr.mxu0 0.0
    %246 = vmatpush1.msra.mxu0 %v81
    %247 = vmatprep.subr.mxu0 0.0
    %248 = vmatpush1.msra.mxu0 %v80
    %249 = vmatprep.subr.mxu0 0.0
    %250 = vmatpush1.msra.mxu0 %v79
    %251 = vmatprep.subr.mxu0 0.0
    %252 = vmatpush1.msra.mxu0 %v78
    %253 = vmatprep.subr.mxu0 0.0
    %254 = vmatpush1.msra.mxu0 %v77
    %255 = vmatprep.subr.mxu0 0.0
    %256 = vmatpush1.msra.mxu0 %v76
    %257 = vmatprep.subr.mxu0 0.0
    %258 = vmatpush1.msra.mxu0 %v75
    %259 = vmatprep.subr.mxu0 0.0
    %260 = vmatpush1.msra.mxu0 %v74
    %261 = vmatprep.subr.mxu0 0.0
    %262 = vmatpush1.msra.mxu0 %v73
    %263 = vmatprep.subr.mxu0 0.0
    %264 = vmatpush1.msra.mxu0 %v72
    %265 = vmatprep.subr.mxu0 0.0
    %266 = vmatpush1.msra.mxu0 %v71
    %267 = vmatprep.subr.mxu0 0.0
    %268 = vmatpush1.msra.mxu0 %v70
    %269 = vmatprep.subr.mxu0 0.0
    %270 = vmatpush1.msra.mxu0 %v69
    %271 = vmatprep.subr.mxu0 0.0
    %272 = vmatpush1.msra.mxu0 %v68
    %273 = vmatprep.subr.mxu0 0.0
    %274 = vmatpush2.msra.mxu0 %v99
    %275 = vmatprep.subr.mxu0 0.0
    %276 = vmatpush2.msra.mxu0 %v98
    %277 = vmatprep.subr.mxu0 0.0
    %278 = vmatpush2.msra.mxu0 %v97
    %279 = vmatprep.subr.mxu0 0.0
    %280 = vmatpush2.msra.mxu0 %v96
    %281 = vmatprep.subr.mxu0 0.0
    %282 = vmatpush2.msra.mxu0 %v95
    %283 = vmatprep.subr.mxu0 0.0
    %284 = vmatpush2.msra.mxu0 %v94
    %285 = vmatprep.subr.mxu0 0.0
    %286 = vmatpush2.msra.mxu0 %v93
    %287 = vmatprep.subr.mxu0 0.0
    %288 = vmatpush2.msra.mxu0 %v92
    %289 = vmatprep.subr.mxu0 0.0
    %290 = vmatpush2.msra.mxu0 %v91
    %291 = vmatprep.subr.mxu0 0.0
    %292 = vmatpush2.msra.mxu0 %v90
    %293 = vmatprep.subr.mxu0 0.0
    %294 = vmatpush2.msra.mxu0 %v89
    %295 = vmatprep.subr.mxu0 0.0
    %296 = vmatpush2.msra.mxu0 %v88
    %297 = vmatprep.subr.mxu0 0.0
    %298 = vmatpush2.msra.mxu0 %v87
    %299 = vmatprep.subr.mxu0 0.0
    %300 = vmatpush2.msra.mxu0 %v86
    %301 = vmatprep.subr.mxu0 0.0
    %302 = vmatpush2.msra.mxu0 %v85
    %303 = vmatprep.subr.mxu0 0.0
    %304 = vmatpush2.msra.mxu0 %v84
    %305 = vmatprep.mubr.f32.mxu0 %v31
    %306 = vmatmul.mubr.f32.gmra.mxu0 %v30
    %v307 = vpop.f32.mrf.mxu0
    %v308 = vadd.f32 %v238, %v307
    %v309 = vpop.f32.mrf.mxu0
    %310 = vdwg.mxu0
    %311 = vmatprep.subr.mxu0 0.0
    %312 = vmatpush1.msra.mxu0 %v115
    %313 = vmatprep.subr.mxu0 0.0
    %314 = vmatpush1.msra.mxu0 %v114
    %315 = vmatprep.subr.mxu0 0.0
    %316 = vmatpush1.msra.mxu0 %v113
    %317 = vmatprep.subr.mxu0 0.0
    %318 = vmatpush1.msra.mxu0 %v112
    %319 = vmatprep.subr.mxu0 0.0
    %320 = vmatpush1.msra.mxu0 %v111
    %321 = vmatprep.subr.mxu0 0.0
    %322 = vmatpush1.msra.mxu0 %v110
    %323 = vmatprep.subr.mxu0 0.0
    %324 = vmatpush1.msra.mxu0 %v109
    %325 = vmatprep.subr.mxu0 0.0
    %326 = vmatpush1.msra.mxu0 %v108
    %327 = vmatprep.subr.mxu0 0.0
    %328 = vmatpush1.msra.mxu0 %v107
    %329 = vmatprep.subr.mxu0 0.0
    %330 = vmatpush1.msra.mxu0 %v106
    %331 = vmatprep.subr.mxu0 0.0
    %332 = vmatpush1.msra.mxu0 %v105
    %333 = vmatprep.subr.mxu0 0.0
    %334 = vmatpush1.msra.mxu0 %v104
    %335 = vmatprep.subr.mxu0 0.0
    %336 = vmatpush1.msra.mxu0 %v103
    %337 = vmatprep.subr.mxu0 0.0
    %338 = vmatpush1.msra.mxu0 %v102
    %339 = vmatprep.subr.mxu0 0.0
    %340 = vmatpush1.msra.mxu0 %v101
    %341 = vmatprep.subr.mxu0 0.0
    %342 = vmatpush1.msra.mxu0 %v100
    %343 = vmatprep.subr.mxu0 0.0
    %344 = vmatpush2.msra.mxu0 %v131
    %345 = vmatprep.subr.mxu0 0.0
    %346 = vmatpush2.msra.mxu0 %v130
    %347 = vmatprep.subr.mxu0 0.0
    %348 = vmatpush2.msra.mxu0 %v129
    %349 = vmatprep.subr.mxu0 0.0
    %350 = vmatpush2.msra.mxu0 %v128
    %351 = vmatprep.subr.mxu0 0.0
    %352 = vmatpush2.msra.mxu0 %v127
    %353 = vmatprep.subr.mxu0 0.0
    %354 = vmatpush2.msra.mxu0 %v126
    %355 = vmatprep.subr.mxu0 0.0
    %356 = vmatpush2.msra.mxu0 %v125
    %357 = vmatprep.subr.mxu0 0.0
    %358 = vmatpush2.msra.mxu0 %v124
    %359 = vmatprep.subr.mxu0 0.0
    %360 = vmatpush2.msra.mxu0 %v123
    %361 = vmatprep.subr.mxu0 0.0
    %362 = vmatpush2.msra.mxu0 %v122
    %363 = vmatprep.subr.mxu0 0.0
    %364 = vmatpush2.msra.mxu0 %v121
    %365 = vmatprep.subr.mxu0 0.0
    %366 = vmatpush2.msra.mxu0 %v120
    %367 = vmatprep.subr.mxu0 0.0
    %368 = vmatpush2.msra.mxu0 %v119
    %369 = vmatprep.subr.mxu0 0.0
    %370 = vmatpush2.msra.mxu0 %v118
    %371 = vmatprep.subr.mxu0 0.0
    %372 = vmatpush2.msra.mxu0 %v117
    %373 = vmatprep.subr.mxu0 0.0
    %374 = vmatpush2.msra.mxu0 %v116
    %375 = vmatprep.mubr.f32.mxu0 %v33
    %376 = vmatmul.mubr.f32.gmra.mxu0 %v32
    %v377 = vpop.f32.mrf.mxu0
    %v378 = vadd.f32 %v308, %v377
    %v379 = vpop.f32.mrf.mxu0
    %380 = vdwg.mxu0
    %381 = vmatprep.subr.mxu0 0.0
    %382 = vmatpush1.msra.mxu0 %v147
    %383 = vmatprep.subr.mxu0 0.0
    %384 = vmatpush1.msra.mxu0 %v146
    %385 = vmatprep.subr.mxu0 0.0
    %386 = vmatpush1.msra.mxu0 %v145
    %387 = vmatprep.subr.mxu0 0.0
    %388 = vmatpush1.msra.mxu0 %v144
    %389 = vmatprep.subr.mxu0 0.0
    %390 = vmatpush1.msra.mxu0 %v143
    %391 = vmatprep.subr.mxu0 0.0
    %392 = vmatpush1.msra.mxu0 %v142
    %393 = vmatprep.subr.mxu0 0.0
    %394 = vmatpush1.msra.mxu0 %v141
    %395 = vmatprep.subr.mxu0 0.0
    %396 = vmatpush1.msra.mxu0 %v140
    %397 = vmatprep.subr.mxu0 0.0
    %398 = vmatpush1.msra.mxu0 %v139
    %399 = vmatprep.subr.mxu0 0.0
    %400 = vmatpush1.msra.mxu0 %v138
    %401 = vmatprep.subr.mxu0 0.0
    %402 = vmatpush1.msra.mxu0 %v137
    %403 = vmatprep.subr.mxu0 0.0
    %404 = vmatpush1.msra.mxu0 %v136
    %405 = vmatprep.subr.mxu0 0.0
    %406 = vmatpush1.msra.mxu0 %v135
    %407 = vmatprep.subr.mxu0 0.0
    %408 = vmatpush1.msra.mxu0 %v134
    %409 = vmatprep.subr.mxu0 0.0
    %410 = vmatpush1.msra.mxu0 %v133
    %411 = vmatprep.subr.mxu0 0.0
    %412 = vmatpush1.msra.mxu0 %v132
    %413 = vmatprep.subr.mxu0 0.0
    %414 = vmatpush2.msra.mxu0 %v163
    %415 = vmatprep.subr.mxu0 0.0
    %416 = vmatpush2.msra.mxu0 %v162
    %417 = vmatprep.subr.mxu0 0.0
    %418 = vmatpush2.msra.mxu0 %v161
    %419 = vmatprep.subr.mxu0 0.0
    %420 = vmatpush2.msra.mxu0 %v160
    %421 = vmatprep.subr.mxu0 0.0
    %422 = vmatpush2.msra.mxu0 %v159
    %423 = vmatprep.subr.mxu0 0.0
    %424 = vmatpush2.msra.mxu0 %v158
    %425 = vmatprep.subr.mxu0 0.0
    %426 = vmatpush2.msra.mxu0 %v157
    %427 = vmatprep.subr.mxu0 0.0
    %428 = vmatpush2.msra.mxu0 %v156
    %429 = vmatprep.subr.mxu0 0.0
    %430 = vmatpush2.msra.mxu0 %v155
    %431 = vmatprep.subr.mxu0 0.0
    %432 = vmatpush2.msra.mxu0 %v154
    %433 = vmatprep.subr.mxu0 0.0
    %434 = vmatpush2.msra.mxu0 %v153
    %435 = vmatprep.subr.mxu0 0.0
    %436 = vmatpush2.msra.mxu0 %v152
    %437 = vmatprep.subr.mxu0 0.0
    %438 = vmatpush2.msra.mxu0 %v151
    %439 = vmatprep.subr.mxu0 0.0
    %440 = vmatpush2.msra.mxu0 %v150
    %441 = vmatprep.subr.mxu0 0.0
    %442 = vmatpush2.msra.mxu0 %v149
    %443 = vmatprep.subr.mxu0 0.0
    %444 = vmatpush2.msra.mxu0 %v148
    %445 = vmatprep.mubr.f32.mxu0 %v35
    %446 = vmatmul.mubr.f32.gmra.mxu0 %v34
    %v447 = vpop.f32.mrf.mxu0
    %v448 = vadd.f32 %v378, %v447
    %v449 = vpop.f32.mrf.mxu0
    %450 = vdwg.mxu0
    %451 = vst [vmem:[%s3] sm:$0xff] %v448
    // Predicated region
    $region18: #{basicnet_forward.1} parent=1 // pred_check
      _
    $region19: #{basicnet_forward.1} parent=1 // pred_check_branch
      %453 = sbr.rel (0) target = $region21
    $region20: #{basicnet_forward.1} parent=1 // pred_region
      _
    $region21: #{basicnet_forward.1} parent=1 // pred_fallthru
      _
    // Predicated region
    $region22: #{basicnet_forward.1} parent=1 // pred_check
      _
    $region23: #{basicnet_forward.1} parent=1 // pred_check_branch
      %455 = sbr.rel (0) target = $region25
    $region24: #{basicnet_forward.1} parent=1 // pred_region
      _
    $region25: #{basicnet_forward.1} parent=1 // pred_fallthru
      _
    %456 = vsyncpa [#allocation3], 1

</llo_original>
